<compile_context>
chip_gen: v5e
topology: v5e:2x2
jax: 0.10.0
libtpu: 0.0.40
codegen_flags: <defaults>
</compile_context>

<pallas_src>
import jax
import jax.numpy as jnp
from jax import lax
from jax.experimental import pallas as pl
from jax.experimental.pallas import tpu as pltpu

BN_EPS = 1e-5
LANES = 128


def _round_up(n: int, m: int) -> int:
    return ((n + m - 1) // m) * m


# ----------------------------------------------------------------------------- kernel
def super_entity_size_kernel(
    x_ref,    # (B, L)    flattened encoder features (encoder-native dtype; upcast inside)
    w1_ref,   # (L, HP)   Linear(latent, hidden) weight, pre-transposed + zero-padded to HP
    vec_ref,  # (5, PMAX) packed row vectors: [g1 | g2 | beta2 | w2_row | b2@col0], zero-padded
    o_ref,    # (B, 128)  prediction broadcast across lanes (wrapper slices col 0)
):
    x = x_ref[...].astype(jnp.float32)            # (B, L), f32 math everywhere (v5e-safe)
    b, l = x.shape
    hp = w1_ref.shape[1]
    inv_b = 1.0 / b

    g1 = vec_ref[0:1, :l]                          # (1, L)
    g2 = vec_ref[1:2, :hp]                         # (1, HP)
    be2 = vec_ref[2:3, :hp]                        # (1, HP)
    w2 = vec_ref[3:4, :hp]                         # (1, HP)
    b2 = vec_ref[4:5, 0:1]                         # (1, 1)

    # ---- BatchNorm1d(latent): one-pass stats.  Only the scale matters: the BN1 shift and the
    # Linear-1 bias are per-column constants that BN2's mean subtraction removes exactly. ----
    s1 = jnp.sum(x, axis=0, keepdims=True)
    ss1 = jnp.sum(x * x, axis=0, keepdims=True)
    mean1 = s1 * inv_b
    var1 = jnp.maximum(ss1 * inv_b - mean1 * mean1, 0.0)   # biased var (PyTorch train mode)
    scale1 = g1 * lax.rsqrt(var1 + BN_EPS)                  # EUP rsqrt
    xs = x * scale1                                          # (B, L)  (B < HP so scale x, not w1)

    # ---- Linear(latent, hidden) on the MXU, f32 accumulate.  Operand dtype follows w1_ref
    # (f32 by default; bf16 when prepare_params(..., matmul_dtype=bf16) on v6e/v7x). ----
    h = jnp.dot(xs.astype(w1_ref.dtype), w1_ref[...],
                preferred_element_type=jnp.float32)          # (B, HP), padded cols exactly 0

    # ---- BatchNorm1d(hidden) stats (padded cols: g2/be2/w2 pads are 0 -> fully inert) ----
    s2 = jnp.sum(h, axis=0, keepdims=True)
    ss2 = jnp.sum(h * h, axis=0, keepdims=True)
    mean2 = s2 * inv_b
    var2 = jnp.maximum(ss2 * inv_b - mean2 * mean2, 0.0)
    scale2 = g2 * lax.rsqrt(var2 + BN_EPS)                   # (1, HP)
    shift2 = be2 - mean2 * scale2                            # (1, HP)

    # ---- BN2 folded into Linear(hidden, 1):
    #   (h*scale2 + shift2) @ w2^T + b2 = sum(h * (scale2*w2), -1) + sum(shift2*w2) + b2
    # VPU multiply + XLU lane reduce; no (B,HP) normalize pass, no N=1 MXU matmul. ----
    w2s = scale2 * w2                                        # (1, HP)
    y = jnp.sum(h * w2s, axis=-1, keepdims=True)             # (B, 1)
    const = jnp.sum(shift2 * w2, axis=-1, keepdims=True) + b2  # (1, 1)

    # Lane-dense output store (broadcast scalar result across 128 lanes).
    o_ref[...] = jnp.broadcast_to(y + const, o_ref.shape)


# ----------------------------------------------------------------------------- parameter prep
def prepare_params(params, matmul_dtype=jnp.float32):
    """One-time parameter packing (hoisted out of the forward path).

    Returns (w1p, vec_slab):
      w1p      : (L, HP) Linear-1 weight, hidden dim zero-padded to a multiple of 128,
                 stored in `matmul_dtype` (f32 default; bf16 for v6e/v7x at scale).
      vec_slab : (5, PMAX) f32 slab packing [g1 | g2 | beta2 | w2_row | b2@col0].
    be1 and b1 are intentionally NOT packed: they are per-column constants added before
    BatchNorm2 and are removed exactly by its mean subtraction (training mode only).
    """
    g1, be1, w1, b1, g2, be2, w2, b2 = params
    del be1, b1
    L, H = w1.shape
    HP = _round_up(H, LANES)
    PMAX = max(_round_up(L, LANES), HP)

    w1p = jnp.zeros((L, HP), matmul_dtype).at[:, :H].set(w1.astype(matmul_dtype))

    vec = jnp.zeros((5, PMAX), jnp.float32)
    vec = vec.at[0, :L].set(g1.astype(jnp.float32))
    vec = vec.at[1, :H].set(g2.astype(jnp.float32))
    vec = vec.at[2, :H].set(be2.astype(jnp.float32))
    vec = vec.at[3, :H].set(w2.reshape(H).astype(jnp.float32))
    vec = vec.at[4, 0].set(b2.reshape(())[()].astype(jnp.float32))
    return (w1p, vec)


# ----------------------------------------------------------------------------- wrapper
def super_entity_size_forward(input_features, prepared, encoder):
    """Matches SuperEntitySize.forward(input_features, encoder) (training-mode BatchNorm)."""
    # TODO(synk): `encoder` is an externally injected nn.Module in the original code; here it
    # is a deterministic stand-in supplied by the caller (plain JAX glue).
    feats = encoder(input_features)[0]                     # (B, C, H, W)
    B = feats.shape[0]
    flat = feats.reshape(B, -1)                            # nn.Flatten(); keep encoder dtype

    w1p, vec = prepared
    L, HP = w1p.shape
    assert flat.shape[1] == L, "latent_space_size mismatch between encoder output and params"

    bytes_accessed = (flat.size * flat.dtype.itemsize
                      + w1p.size * w1p.dtype.itemsize
                      + vec.size * vec.dtype.itemsize
                      + B * LANES * 4)
    flops = 2 * B * L * HP + 8 * B * L + 6 * B * HP
    vmem_limit = int(min(64 * 1024 * 1024, max(4 * 1024 * 1024, 4 * bytes_accessed)))

    # Single gridless invocation: everything fits comfortably in VMEM at these shapes.
    out_wide = pl.pallas_call(
        super_entity_size_kernel,
        out_shape=jax.ShapeDtypeStruct((B, LANES), jnp.float32),
        in_specs=[pl.BlockSpec(memory_space=pltpu.MemorySpace.VMEM)] * 3,
        out_specs=pl.BlockSpec(memory_space=pltpu.MemorySpace.VMEM),
        compiler_params=pltpu.CompilerParams(vmem_limit_bytes=vmem_limit),
        cost_estimate=pl.CostEstimate(
            flops=flops, transcendentals=L + HP, bytes_accessed=bytes_accessed),
    )(flat, w1p, vec)
    return out_wide[:, :1]                                 # (B, 1)


# ----------------------------------------------------------------------------- reference / init
def _batchnorm_train_ref(x, gamma, beta):
    # PyTorch BatchNorm1d in training mode: batch mean, biased batch variance (two-pass).
    mean = jnp.mean(x, axis=0, keepdims=True)
    var = jnp.mean((x - mean) ** 2, axis=0, keepdims=True)
    xn = (x - mean) * lax.rsqrt(var + BN_EPS)
    return xn * gamma + beta


def reference_forward(input_features, params, encoder):
    feats = encoder(input_features)[0]
    B = feats.shape[0]
    x = feats.reshape(B, -1).astype(jnp.float32)
    g1, be1, w1, b1, g2, be2, w2, b2 = params
    h = _batchnorm_train_ref(x, g1[None, :], be1[None, :])
    h = h @ w1 + b1[None, :]
    h = _batchnorm_train_ref(h, g2[None, :], be2[None, :])
    return h @ w2 + b2[None, :]


def make_params(key, latent_space_size, hidden_layer_size):
    """Deterministic parameter init mirroring the module shapes
    (BatchNorm1d(L), Linear(L,H), BatchNorm1d(H), Linear(H,1))."""
    k1, k2, k3, k4, k5, k6, k7, k8 = jax.random.split(key, 8)
    L, H = latent_space_size, hidden_layer_size
    g1 = 1.0 + 0.1 * jax.random.normal(k1, (L,), jnp.float32)
    be1 = 0.1 * jax.random.normal(k2, (L,), jnp.float32)
    g2 = 1.0 + 0.1 * jax.random.normal(k3, (H,), jnp.float32)
    be2 = 0.1 * jax.random.normal(k4, (H,), jnp.float32)
    lim1 = 1.0 / float(jnp.sqrt(float(L)))
    w1 = jax.random.uniform(k5, (L, H), jnp.float32, -lim1, lim1)
    b1 = jax.random.uniform(k6, (H,), jnp.float32, -lim1, lim1)
    lim2 = 1.0 / float(jnp.sqrt(float(H)))
    w2 = jax.random.uniform(k7, (H, 1), jnp.float32, -lim2, lim2)
    b2 = jax.random.uniform(k8, (1,), jnp.float32, -lim2, lim2)
    return (g1, be1, w1, b1, g2, be2, w2, b2)


if __name__ == "__main__":
    # Shapes consistent with the module's usage:
    #   get_input_features -> (1, H, W) per sample, batched -> (B, 1, 16, 16)
    #   stand-in encoder is identity, so latent_space_size = 1*16*16 = 256
    B, C, Himg, Wimg = 8, 1, 16, 16
    latent_space_size = C * Himg * Wimg   # 256
    hidden_layer_size = 64                # padded to 128 lanes in prepare_params

    key = jax.random.PRNGKey(0)
    kx, kp = jax.random.split(key)
    x = jax.random.normal(kx, (B, C, Himg, Wimg), jnp.float32)
    params = make_params(kp, latent_space_size, hidden_layer_size)

    # Stand-in encoder: returns a tuple like the real encoder (features is element [0]).
    encoder = lambda inp: (inp,)

    # One-time parameter prep (hoisted out of the per-call forward path).
    prepared = jax.block_until_ready(prepare_params(params))

    out = super_entity_size_forward(x, prepared, encoder)
    out = jax.block_until_ready(out)

    ref = reference_forward(x, params, encoder)
    assert out.shape == (B, 1)
    assert jnp.allclose(out, ref, rtol=1e-4, atol=1e-4), (
        f"max abs diff {float(jnp.max(jnp.abs(out - ref)))}")

    print("KERNEL_OK")
</pallas_src>

<mosaic_0001>
module attributes {stable_mosaic.version = 11 : i64} {
  func.func @super_entity_size_kernel(%arg0: memref<8x256xf32, #tpu.memory_space<vmem>>, %arg1: memref<256x128xf32, #tpu.memory_space<vmem>>, %arg2: memref<5x256xf32, #tpu.memory_space<vmem>>, %arg3: memref<8x128xf32, #tpu.memory_space<vmem>>) attributes {dimension_semantics = [], scalar_prefetch = 0 : i64, scratch_operands = 0 : i64, tpu.core_type = #tpu.core_type<tc>} {
    %c0 = arith.constant 0 : index
    %c0_0 = arith.constant 0 : index
    %0 = vector.load %arg0[%c0, %c0_0] : memref<8x256xf32, #tpu.memory_space<vmem>>, vector<8x256xf32>
    %c0_1 = arith.constant 0 : index
    %c0_2 = arith.constant 0 : index
    %1 = vector.load %arg2[%c0_1, %c0_2] : memref<5x256xf32, #tpu.memory_space<vmem>>, vector<1x256xf32>
    %c1 = arith.constant 1 : index
    %c0_3 = arith.constant 0 : index
    %2 = vector.load %arg2[%c1, %c0_3] : memref<5x256xf32, #tpu.memory_space<vmem>>, vector<1x128xf32>
    %c2 = arith.constant 2 : index
    %c0_4 = arith.constant 0 : index
    %3 = vector.load %arg2[%c2, %c0_4] : memref<5x256xf32, #tpu.memory_space<vmem>>, vector<1x128xf32>
    %c3 = arith.constant 3 : index
    %c0_5 = arith.constant 0 : index
    %4 = vector.load %arg2[%c3, %c0_5] : memref<5x256xf32, #tpu.memory_space<vmem>>, vector<1x128xf32>
    %c4 = arith.constant 4 : index
    %c0_6 = arith.constant 0 : index
    %5 = vector.load %arg2[%c4, %c0_6] : memref<5x256xf32, #tpu.memory_space<vmem>>, vector<1x1xf32>
    %cst = arith.constant dense<0.000000e+00> : vector<256xf32>
    %6 = vector.multi_reduction <add>, %0, %cst [0] : vector<8x256xf32> to vector<256xf32>
    %7 = vector.shape_cast %6 : vector<256xf32> to vector<1x256xf32>
    %8 = arith.mulf %0, %0 : vector<8x256xf32>
    %cst_7 = arith.constant dense<0.000000e+00> : vector<256xf32>
    %9 = vector.multi_reduction <add>, %8, %cst_7 [0] : vector<8x256xf32> to vector<256xf32>
    %10 = vector.shape_cast %9 : vector<256xf32> to vector<1x256xf32>
    %cst_8 = arith.constant 1.250000e-01 : f32
    %11 = vector.broadcast %cst_8 : f32 to vector<1x256xf32>
    %12 = arith.mulf %7, %11 : vector<1x256xf32>
    %cst_9 = arith.constant 1.250000e-01 : f32
    %13 = vector.broadcast %cst_9 : f32 to vector<1x256xf32>
    %14 = arith.mulf %10, %13 : vector<1x256xf32>
    %15 = arith.mulf %12, %12 : vector<1x256xf32>
    %16 = arith.subf %14, %15 : vector<1x256xf32>
    %cst_10 = arith.constant 0.000000e+00 : f32
    %17 = vector.broadcast %cst_10 : f32 to vector<1x256xf32>
    %18 = arith.maximumf %16, %17 : vector<1x256xf32>
    %cst_11 = arith.constant 9.99999974E-6 : f32
    %19 = vector.broadcast %cst_11 : f32 to vector<1x256xf32>
    %20 = arith.addf %18, %19 : vector<1x256xf32>
    %21 = math.rsqrt %20 : vector<1x256xf32>
    %22 = arith.mulf %1, %21 : vector<1x256xf32>
    %23 = vector.broadcast %22 : vector<1x256xf32> to vector<8x256xf32>
    %24 = arith.mulf %0, %23 : vector<8x256xf32>
    %c0_12 = arith.constant 0 : index
    %c0_13 = arith.constant 0 : index
    %25 = vector.load %arg1[%c0_12, %c0_13] : memref<256x128xf32, #tpu.memory_space<vmem>>, vector<256x128xf32>
    %cst_14 = arith.constant dense<0.000000e+00> : vector<8x128xf32>
    %26 = tpu.matmul %24, %25, %cst_14 {dimension_numbers = #tpu.dot_dimension_numbers<[1], [0], [0], [1], [0, 0, 1, 1], [], []>} : vector<8x256xf32>, vector<256x128xf32>, vector<8x128xf32> -> vector<8x128xf32>
    %cst_15 = arith.constant dense<0.000000e+00> : vector<128xf32>
    %27 = vector.multi_reduction <add>, %26, %cst_15 [0] : vector<8x128xf32> to vector<128xf32>
    %28 = vector.shape_cast %27 : vector<128xf32> to vector<1x128xf32>
    %29 = arith.mulf %26, %26 : vector<8x128xf32>
    %cst_16 = arith.constant dense<0.000000e+00> : vector<128xf32>
    %30 = vector.multi_reduction <add>, %29, %cst_16 [0] : vector<8x128xf32> to vector<128xf32>
    %31 = vector.shape_cast %30 : vector<128xf32> to vector<1x128xf32>
    %cst_17 = arith.constant 1.250000e-01 : f32
    %32 = vector.broadcast %cst_17 : f32 to vector<1x128xf32>
    %33 = arith.mulf %28, %32 : vector<1x128xf32>
    %cst_18 = arith.constant 1.250000e-01 : f32
    %34 = vector.broadcast %cst_18 : f32 to vector<1x128xf32>
    %35 = arith.mulf %31, %34 : vector<1x128xf32>
    %36 = arith.mulf %33, %33 : vector<1x128xf32>
    %37 = arith.subf %35, %36 : vector<1x128xf32>
    %cst_19 = arith.constant 0.000000e+00 : f32
    %38 = vector.broadcast %cst_19 : f32 to vector<1x128xf32>
    %39 = arith.maximumf %37, %38 : vector<1x128xf32>
    %cst_20 = arith.constant 9.99999974E-6 : f32
    %40 = vector.broadcast %cst_20 : f32 to vector<1x128xf32>
    %41 = arith.addf %39, %40 : vector<1x128xf32>
    %42 = math.rsqrt %41 : vector<1x128xf32>
    %43 = arith.mulf %2, %42 : vector<1x128xf32>
    %44 = arith.mulf %33, %43 : vector<1x128xf32>
    %45 = arith.subf %3, %44 : vector<1x128xf32>
    %46 = arith.mulf %43, %4 : vector<1x128xf32>
    %47 = vector.broadcast %46 : vector<1x128xf32> to vector<8x128xf32>
    %48 = arith.mulf %26, %47 : vector<8x128xf32>
    %cst_21 = arith.constant dense<0.000000e+00> : vector<8xf32>
    %49 = vector.multi_reduction <add>, %48, %cst_21 [1] : vector<8x128xf32> to vector<8xf32>
    %50 = vector.shape_cast %49 : vector<8xf32> to vector<8x1xf32>
    %51 = arith.mulf %45, %4 : vector<1x128xf32>
    %cst_22 = arith.constant dense<0.000000e+00> : vector<1xf32>
    %52 = vector.multi_reduction <add>, %51, %cst_22 [1] : vector<1x128xf32> to vector<1xf32>
    %53 = vector.shape_cast %52 : vector<1xf32> to vector<1x1xf32>
    %54 = arith.addf %53, %5 : vector<1x1xf32>
    %55 = vector.broadcast %54 : vector<1x1xf32> to vector<8x1xf32>
    %56 = arith.addf %50, %55 : vector<8x1xf32>
    %57 = vector.shape_cast %56 : vector<8x1xf32> to vector<8x1xf32>
    %58 = vector.broadcast %57 : vector<8x1xf32> to vector<8x128xf32>
    %c0_23 = arith.constant 0 : index
    %c0_24 = arith.constant 0 : index
    %59 = vector.load %arg3[%c0_23, %c0_24] : memref<8x128xf32, #tpu.memory_space<vmem>>, vector<8x128xf32>
    tpu.vector_store %arg3[%c0_23, %c0_24], %58 {strides = array<i32>} : memref<8x128xf32, #tpu.memory_space<vmem>>, vector<8x128xf32>,
    return
  }
}

</mosaic_0001>

<llo_original>
// kernel: tpu_custom_call.1
$region0: #{tpu_custom_call.1}
  #allocation0 [shape = 'u32[]', space=smem, size = 0x4, offset = 0x4, fixed_abs, tag = 'smem constant byte address 0x4 - core index']
  #allocation1 [shape = 'u32[72,128]{1,0:T(1,128)}', space=vmem, size = 0x9000, scoped, tag = 'internal scratch']
  %s0 = inlined_call_operand.hbm [shape: f32[8,256], index: 0, kind: input, shape index: {}]
  %s1 = inlined_call_operand.hbm [shape: f32[256,128], index: 1, kind: input, shape index: {}]
  %s2 = inlined_call_operand.hbm [shape: f32[5,256], index: 2, kind: input, shape index: {}]
  %s3 = inlined_call_operand.hbm [shape: f32[8,128], index: 3, kind: output, shape index: {}]
  %s4 = sld [smem:[#allocation0]]
  $region34: #{tpu_custom_call.1} parent=0
    _
  %s6 = ssub.s32 1, %s4
  %s7 = scalar_select 0, %s6, %s4
  $region1: #{tpu_custom_call.1} parent=0
    #allocation2 [shape = 'u8[8192]{0}', space=vmem, size = 0x2000, scoped, tag = 'input window, operand 0, single buffered']
    #allocation3 [shape = 's32[1]{0}', space=sflag, size = 0x4, scoped, tag = 'scoped memory for tpu_custom_call.1']
    #allocation4 [shape = 's32[1]{0}', space=sflag, size = 0x4, scoped, tag = 'scoped memory for tpu_custom_call.1']
    #allocation5 [shape = 'u8[131072]{0}', space=vmem, size = 0x20000, scoped, tag = 'input window, operand 1, single buffered']
    #allocation6 [shape = 's32[1]{0}', space=sflag, size = 0x4, scoped, tag = 'scoped memory for tpu_custom_call.1']
    #allocation7 [shape = 'u8[8192]{0}', space=vmem, size = 0x2000, scoped, tag = 'input window, operand 2, single buffered']
    #allocation8 [shape = 'u8[4096]{0}', space=vmem, size = 0x1000, scoped, tag = 'output window, operand 0, single buffered']
    %8 = vsyncpa [#allocation3], 0
    %9 = vsyncpa [#allocation6], 0
    %10 = vsyncpa [#allocation4], 0
    // Predicated region
    $region2: #{tpu_custom_call.1} parent=1 // pred_check
      _
    $region3: #{tpu_custom_call.1} parent=1 // pred_check_branch
      %12 = sbr.rel (0) target = $region5
    $region4: #{tpu_custom_call.1} parent=1 // pred_region
      %14 = vsyncadd [#allocation3], 0
      %s16 = sshll.u32 %s0, 4
      %s17 = int_to_ptr.hbm [resolvable:$true] %s16
      %s18 = sshll.u32 [#allocation2], 4
      %s19 = int_to_ptr.vmem [resolvable:$true] %s18
      %21 = dma.hbm_to_vmem [thread:$0]  %s17, 256, %s19, [#allocation3]
    $region5: #{tpu_custom_call.1} parent=1 // pred_fallthru
      _
    // Predicated region
    $region6: #{tpu_custom_call.1} parent=1 // pred_check
      _
    $region7: #{tpu_custom_call.1} parent=1 // pred_check_branch
      %23 = sbr.rel (0) target = $region9
    $region8: #{tpu_custom_call.1} parent=1 // pred_region
      %25 = vsyncadd [#allocation6], 0
      %s26 = sshll.u32 %s1, 4
      %s27 = int_to_ptr.hbm [resolvable:$true] %s26
      %s28 = sshll.u32 [#allocation5], 4
      %s29 = int_to_ptr.vmem [resolvable:$true] %s28
      %34 = dma.hbm_to_vmem [thread:$0]  %s27, 4096, %s29, [#allocation6], 128, 128, 8
    $region9: #{tpu_custom_call.1} parent=1 // pred_fallthru
      _
    // Predicated region
    $region10: #{tpu_custom_call.1} parent=1 // pred_check
      _
    $region11: #{tpu_custom_call.1} parent=1 // pred_check_branch
      %36 = sbr.rel (0) target = $region13
    $region12: #{tpu_custom_call.1} parent=1 // pred_region
      %38 = vsyncadd [#allocation6], 0
      %s40 = sshll.u32 %s2, 4
      %s41 = int_to_ptr.hbm [resolvable:$true] %s40
      %s42 = sshll.u32 [#allocation7], 4
      %s43 = int_to_ptr.vmem [resolvable:$true] %s42
      %45 = dma.hbm_to_vmem [thread:$0]  %s41, 256, %s43, [#allocation6]
    $region13: #{tpu_custom_call.1} parent=1 // pred_fallthru
      _
    // Predicated region
    $region14: #{tpu_custom_call.1} parent=1 // pred_check
      _
    $region15: #{tpu_custom_call.1} parent=1 // pred_check_branch
      %47 = sbr.rel (0) target = $region17
    $region16: #{tpu_custom_call.1} parent=1 // pred_region
      %49 = dma.done [#allocation3], 256
    $region17: #{tpu_custom_call.1} parent=1 // pred_fallthru
      _
    // Predicated region
    $region18: #{tpu_custom_call.1} parent=1 // pred_check
      _
    $region19: #{tpu_custom_call.1} parent=1 // pred_check_branch
      %51 = sbr.rel (0) target = $region21
    $region20: #{tpu_custom_call.1} parent=1 // pred_region
      %53 = dma.done [#allocation6], 4096
    $region21: #{tpu_custom_call.1} parent=1 // pred_fallthru
      _
    // Predicated region
    $region22: #{tpu_custom_call.1} parent=1 // pred_check
      _
    $region23: #{tpu_custom_call.1} parent=1 // pred_check_branch
      %55 = sbr.rel (0) target = $region25
    $region24: #{tpu_custom_call.1} parent=1 // pred_region
      %57 = dma.done [#allocation6], 256
    $region25: #{tpu_custom_call.1} parent=1 // pred_fallthru
      _
    %v58 = vld [vmem:[#allocation2] sm:$0xff]
    %v59 = vld [vmem:[#allocation2 + $0x8] sm:$0xff]
    %v60 = vld [vmem:[#allocation7] ss:$8 sm:$0x3]
    %v61 = vld [vmem:[#allocation7 + $0x1] ss:$0 sm:$0xff]
    %v62 = vld [vmem:[#allocation7 + $0x2] ss:$0 sm:$0xff]
    %v63 = vld [vmem:[#allocation7 + $0x3] ss:$0 sm:$0xff]
    %v64 = vld [vmem:[#allocation7 + $0x4] ss:$0 sm:$0xff]
    %v65 = vrot.slane %v58, 4
    %v66 = vadd.f32 %v58, %v65
    %v67 = vrot.slane %v66, 2
    %v68 = vadd.f32 %v66, %v67
    %v69 = vrot.slane %v68, 1
    %v70 = vadd.f32 %v68, %v69
    %v71 = vrot.slane %v59, 4
    %v72 = vadd.f32 %v59, %v71
    %v73 = vrot.slane %v72, 2
    %v74 = vadd.f32 %v72, %v73
    %v75 = vrot.slane %v74, 1
    %v76 = vadd.f32 %v74, %v75
    %v77 = vmul.f32 %v58, %v58
    %v78 = vmul.f32 %v59, %v59
    %v79 = vrot.slane %v77, 4
    %v80 = vadd.f32 %v77, %v79
    %v81 = vrot.slane %v80, 2
    %v82 = vadd.f32 %v80, %v81
    %v83 = vrot.slane %v82, 1
    %v84 = vadd.f32 %v82, %v83
    %v85 = vrot.slane %v78, 4
    %v86 = vadd.f32 %v78, %v85
    %v87 = vrot.slane %v86, 2
    %v88 = vadd.f32 %v86, %v87
    %v89 = vrot.slane %v88, 1
    %v90 = vadd.f32 %v88, %v89
    %v91 = vmul.f32 %v70, 0.125
    %v92 = vmul.f32 %v76, 0.125
    %v93 = vmul.f32 %v84, 0.125
    %v94 = vmul.f32 %v90, 0.125
    %v95 = vmul.f32 %v91, %v91
    %v96 = vmul.f32 %v92, %v92
    %v97 = vsub.f32 %v93, %v95
    %v98 = vsub.f32 %v94, %v96
    %v99 = vmax.f32 %v97, 0.0
    %v100 = vmax.f32 %v98, 0.0
    %v101 = vadd.f32 %v99, 1e-05
    %v102 = vadd.f32 %v100, 1e-05
    %v103 = vrsqrt.pop %v101
    %v104 = vmul.f32 %v103, %v101
    %v105 = vmul.f32 %v104, %v103
    %v106 = vmul.f32 0.5, %v105
    %v107 = vsub.f32 1.5, %v106
    %v108 = vmul.f32 %v103, %v107
    %vm109 = vweird.f32 %v101
    %vm110 = vweird.f32 %v103
    %vm111 = vmor %vm109, %vm110
    %v112 = vsel %vm111, %v103, %v108
    %v113 = vrsqrt.pop %v102
    %v114 = vmul.f32 %v113, %v102
    %v115 = vmul.f32 %v114, %v113
    %v116 = vmul.f32 0.5, %v115
    %v117 = vsub.f32 1.5, %v116
    %v118 = vmul.f32 %v113, %v117
    %vm119 = vweird.f32 %v102
    %vm120 = vweird.f32 %v113
    %vm121 = vmor %vm119, %vm120
    %v122 = vsel %vm121, %v113, %v118
    %v125 = vrot.slane %v122, 7
    %vm126 = vcmask 1040384
    %v127 = vsel %vm126, %v112, %v125
    %v129 = vmul.f32 %v60, %v127
    %v131 = vperm.slane %v129, 0
    %v132 = vperm.slane %v129, 1
    %v135 = vmul.f32 %v58, %v131
    %v136 = vmul.f32 %v59, %v132
    %v137 = vld [vmem:[#allocation5] sm:$0xff]
    %v138 = vld [vmem:[#allocation5 + $0x8] sm:$0xff]
    %v139 = vld [vmem:[#allocation5 + $0x10] sm:$0xff]
    %v140 = vld [vmem:[#allocation5 + $0x18] sm:$0xff]
    %v141 = vld [vmem:[#allocation5 + $0x20] sm:$0xff]
    %v142 = vld [vmem:[#allocation5 + $0x28] sm:$0xff]
    %v143 = vld [vmem:[#allocation5 + $0x30] sm:$0xff]
    %v144 = vld [vmem:[#allocation5 + $0x38] sm:$0xff]
    %v145 = vld [vmem:[#allocation5 + $0x40] sm:$0xff]
    %v146 = vld [vmem:[#allocation5 + $0x48] sm:$0xff]
    %v147 = vld [vmem:[#allocation5 + $0x50] sm:$0xff]
    %v148 = vld [vmem:[#allocation5 + $0x58] sm:$0xff]
    %v149 = vld [vmem:[#allocation5 + $0x60] sm:$0xff]
    %v150 = vld [vmem:[#allocation5 + $0x68] sm:$0xff]
    %v151 = vld [vmem:[#allocation5 + $0x70] sm:$0xff]
    %v152 = vld [vmem:[#allocation5 + $0x78] sm:$0xff]
    %v153 = vld [vmem:[#allocation5 + $0x80] sm:$0xff]
    %v154 = vld [vmem:[#allocation5 + $0x88] sm:$0xff]
    %v155 = vld [vmem:[#allocation5 + $0x90] sm:$0xff]
    %v156 = vld [vmem:[#allocation5 + $0x98] sm:$0xff]
    %v157 = vld [vmem:[#allocation5 + $0xa0] sm:$0xff]
    %v158 = vld [vmem:[#allocation5 + $0xa8] sm:$0xff]
    %v159 = vld [vmem:[#allocation5 + $0xb0] sm:$0xff]
    %v160 = vld [vmem:[#allocation5 + $0xb8] sm:$0xff]
    %v161 = vld [vmem:[#allocation5 + $0xc0] sm:$0xff]
    %v162 = vld [vmem:[#allocation5 + $0xc8] sm:$0xff]
    %v163 = vld [vmem:[#allocation5 + $0xd0] sm:$0xff]
    %v164 = vld [vmem:[#allocation5 + $0xd8] sm:$0xff]
    %v165 = vld [vmem:[#allocation5 + $0xe0] sm:$0xff]
    %v166 = vld [vmem:[#allocation5 + $0xe8] sm:$0xff]
    %v167 = vld [vmem:[#allocation5 + $0xf0] sm:$0xff]
    %v168 = vld [vmem:[#allocation5 + $0xf8] sm:$0xff]
    %169 = vmatpush.msra.mxu0 %v152
    %170 = vmatpush.msra.mxu0 %v151
    %171 = vmatpush.msra.mxu0 %v150
    %172 = vmatpush.msra.mxu0 %v149
    %173 = vmatpush.msra.mxu0 %v148
    %174 = vmatpush.msra.mxu0 %v147
    %175 = vmatpush.msra.mxu0 %v146
    %176 = vmatpush.msra.mxu0 %v145
    %177 = vmatpush.msra.mxu0 %v144
    %178 = vmatpush.msra.mxu0 %v143
    %179 = vmatpush.msra.mxu0 %v142
    %180 = vmatpush.msra.mxu0 %v141
    %181 = vmatpush.msra.mxu0 %v140
    %182 = vmatpush.msra.mxu0 %v139
    %183 = vmatpush.msra.mxu0 %v138
    %184 = vmatpush.msra.mxu0 %v137
    %185 = vmatmul.f32.gmra.mxu0 %v135
    %v186 = vpop.f32.mrf.mxu0
    %v187 = vadd.f32 0.0, %v186
    %188 = vdwg.mxu0
    %189 = vmatpush.msra.mxu0 %v168
    %190 = vmatpush.msra.mxu0 %v167
    %191 = vmatpush.msra.mxu0 %v166
    %192 = vmatpush.msra.mxu0 %v165
    %193 = vmatpush.msra.mxu0 %v164
    %194 = vmatpush.msra.mxu0 %v163
    %195 = vmatpush.msra.mxu0 %v162
    %196 = vmatpush.msra.mxu0 %v161
    %197 = vmatpush.msra.mxu0 %v160
    %198 = vmatpush.msra.mxu0 %v159
    %199 = vmatpush.msra.mxu0 %v158
    %200 = vmatpush.msra.mxu0 %v157
    %201 = vmatpush.msra.mxu0 %v156
    %202 = vmatpush.msra.mxu0 %v155
    %203 = vmatpush.msra.mxu0 %v154
    %204 = vmatpush.msra.mxu0 %v153
    %205 = vmatmul.f32.gmra.mxu0 %v136
    %v206 = vpop.f32.mrf.mxu0
    %v207 = vadd.f32 %v187, %v206
    %208 = vdwg.mxu0
    %v209 = vrot.slane %v207, 4
    %v210 = vadd.f32 %v207, %v209
    %v211 = vrot.slane %v210, 2
    %v212 = vadd.f32 %v210, %v211
    %v213 = vrot.slane %v212, 1
    %v214 = vadd.f32 %v212, %v213
    %v215 = vmul.f32 %v207, %v207
    %v216 = vrot.slane %v215, 4
    %v217 = vadd.f32 %v215, %v216
    %v218 = vrot.slane %v217, 2
    %v219 = vadd.f32 %v217, %v218
    %v220 = vrot.slane %v219, 1
    %v221 = vadd.f32 %v219, %v220
    %v222 = vmul.f32 %v214, 0.125
    %v223 = vmul.f32 %v221, 0.125
    %v224 = vmul.f32 %v222, %v222
    %v225 = vsub.f32 %v223, %v224
    %v226 = vmax.f32 %v225, 0.0
    %v227 = vadd.f32 %v226, 1e-05
    %v228 = vrsqrt.pop %v227
    %v229 = vmul.f32 %v228, %v227
    %v230 = vmul.f32 %v229, %v228
    %v231 = vmul.f32 0.5, %v230
    %v232 = vsub.f32 1.5, %v231
    %v233 = vmul.f32 %v228, %v232
    %vm234 = vweird.f32 %v227
    %vm235 = vweird.f32 %v228
    %vm236 = vmor %vm234, %vm235
    %v237 = vsel %vm236, %v228, %v233
    %v238 = vmul.f32 %v61, %v237
    %v239 = vmul.f32 %v222, %v238
    %v240 = vsub.f32 %v62, %v239
    %v241 = vmul.f32 %v238, %v63
    %v242 = vmul.f32 %v207, %v241
    %243 = vadd.xlane.f32.xlu0 %v242
    %v244 = vpop.xlane.xlu0 %243
    %v245 = vmul.f32 %v240, %v63
    %246 = vadd.xlane.f32.xlu0 %v245
    %v247 = vpop.xlane.xlu0 %246
    %v248 = vadd.f32 %v247, %v64
    %v249 = vadd.f32 %v244, %v248
    %251 = vset.pattern.permute.xlu0 0
    %252 = vperm.xlu0 %251, %v249
    %v253 = vpop.permute.xlu0 %252
    %255 = vst [vmem:[#allocation8] sm:$0xff] %v253
    // Predicated region
    $region26: #{tpu_custom_call.1} parent=1 // pred_check
      _
    $region27: #{tpu_custom_call.1} parent=1 // pred_check_branch
      %257 = sbr.rel (0) target = $region29
    $region28: #{tpu_custom_call.1} parent=1 // pred_region
      %259 = vsyncadd [#allocation4], 0
      %s261 = sshll.u32 [#allocation8], 4
      %s262 = int_to_ptr.vmem [resolvable:$true] %s261
      %s263 = sshll.u32 %s3, 4
      %s264 = int_to_ptr.hbm [resolvable:$true] %s263
      %266 = dma.vmem_to_hbm [thread:$0]  %s262, 128, %s264, [#allocation4]
    $region29: #{tpu_custom_call.1} parent=1 // pred_fallthru
      _
    // Predicated region
    $region30: #{tpu_custom_call.1} parent=1 // pred_check
      _
    $region31: #{tpu_custom_call.1} parent=1 // pred_check_branch
      %268 = sbr.rel (0) target = $region33
    $region32: #{tpu_custom_call.1} parent=1 // pred_region
      %270 = dma.done [#allocation4], 128
    $region33: #{tpu_custom_call.1} parent=1 // pred_fallthru
      _
    %271 = vsyncpa [#allocation3], 1
    %272 = vsyncpa [#allocation6], 1
    %273 = vsyncpa [#allocation4], 1

</llo_original>
